<compile_context>
chip_gen: v6e
topology: v6e:2x2x1
jax: 0.10.0
libtpu: 0.0.40
codegen_flags: <defaults>
</compile_context>

<pallas_src>
import numpy as np
import jax
import jax.numpy as jnp
from jax.experimental import pallas as pl
from jax.experimental.pallas import tpu as pltpu


def _round_up(n, m):
    return ((n + m - 1) // m) * m


def _fm_kernel(x_ref, v_ref, w_ref, b_ref, o_ref):
    # x_ref: (TB, D) f32   batch tile of dense inputs
    # v_ref: (D, K)  f32   FM factor matrix (resident across tiles)
    # w_ref: (1, D)  f32   linear weight (PyTorch nn.Linear layout)
    # b_ref: (1, 1)  f32   linear bias
    # o_ref: (TB, 1) f32   output tile
    x = x_ref[...]
    v = v_ref[...]

    # Pairwise-interaction term: two MXU matmuls, f32 accumulate.
    xv = jnp.dot(x, v, preferred_element_type=jnp.float32)            # (TB, K)
    x2v2 = jnp.dot(x * x, v * v, preferred_element_type=jnp.float32)  # (TB, K)
    pair = jnp.sum(xv * xv - x2v2, axis=1, keepdims=True)             # (TB, 1)

    # Linear term on VPU + XLU (an N=1 MXU matmul would waste the array).
    lin = jnp.sum(x * w_ref[...], axis=1, keepdims=True)              # (TB, 1)

    o_ref[...] = lin + b_ref[...] + 0.5 * pair


def _pick_tile_b(B, D, K, max_tile=512, vmem_budget=24 << 20):
    """Largest sublane-aligned batch tile that keeps double-buffered VMEM modest."""
    tile = min(max_tile, _round_up(B, 8))
    tile = _round_up(tile, 8)
    while tile > 8:
        # 2x double-buffered x tile + resident v/w + f32 intermediates (xv, x2v2, x*x).
        usage = 4 * (2 * tile * D + D * K + D + 3 * tile * max(D, K) + 2 * tile)
        if usage <= vmem_budget:
            break
        tile //= 2
        tile = _round_up(tile, 8)
    return max(tile, 8)


def factorization_machine(x, v, w, b, *, tile_b=None):
    """FM forward: x (B, D) f32, v (D, K) f32, w (1, D) f32, b (1,) f32 -> (B, 1)."""
    B, D = x.shape
    K = v.shape[1]
    x = x.astype(jnp.float32)
    v = v.astype(jnp.float32)
    w = jnp.reshape(w, (1, D)).astype(jnp.float32)
    b = jnp.reshape(jnp.asarray(b, dtype=jnp.float32), (1, 1))

    if tile_b is None:
        tile_b = _pick_tile_b(B, D, K)
    tile_b = min(tile_b, _round_up(B, 8))

    Bp = _round_up(B, tile_b)
    if Bp != B:
        x = jnp.pad(x, ((0, Bp - B), (0, 0)))

    out = pl.pallas_call(
        _fm_kernel,
        out_shape=jax.ShapeDtypeStruct((Bp, 1), jnp.float32),
        grid_spec=pl.GridSpec(
            grid=(Bp // tile_b,),
            in_specs=[
                pl.BlockSpec((tile_b, D), lambda i: (i, 0)),  # x batch tile
                pl.BlockSpec((D, K), lambda i: (0, 0)),       # v (resident)
                pl.BlockSpec((1, D), lambda i: (0, 0)),       # linear weight
                pl.BlockSpec((1, 1), lambda i: (0, 0)),       # linear bias
            ],
            out_specs=pl.BlockSpec((tile_b, 1), lambda i: (i, 0)),
        ),
        compiler_params=pltpu.CompilerParams(
            dimension_semantics=("parallel",)),  # batch tiles independent (v7x megacore)
        cost_estimate=pl.CostEstimate(
            flops=4 * Bp * D * K + 4 * Bp * D,
            transcendentals=0,
            bytes_accessed=4 * (Bp * D + D * K + D + 1 + Bp)),
    )(x, v, w, b)
    return out[:B]


if __name__ == "__main__":
    # Small shapes consistent with the module: batch=8, input_dim=32, latent_dim=8
    B, D, K = 8, 32, 8

    key = jax.random.PRNGKey(0)
    kx, kv, kw, kb = jax.random.split(key, 4)

    x = jax.random.uniform(kx, (B, D), dtype=jnp.float32)            # dense features
    v = jax.random.uniform(kv, (D, K), dtype=jnp.float32)            # torch.rand init
    bound = 1.0 / float(np.sqrt(D))
    w = jax.random.uniform(kw, (1, D), dtype=jnp.float32, minval=-bound, maxval=bound)
    b = jax.random.uniform(kb, (1,), dtype=jnp.float32, minval=-bound, maxval=bound)

    out = jax.block_until_ready(factorization_machine(x, v, w, b))

    # NumPy f32 reference of the PyTorch forward.
    xn, vn, wn, bn = map(np.asarray, (x, v, w, b))
    lin = xn @ wn.T + bn
    square_of_sum = (xn @ vn) ** 2
    sum_of_square = (xn ** 2) @ (vn ** 2)
    ref = lin + 0.5 * np.sum(square_of_sum - sum_of_square, axis=1, keepdims=True)

    assert out.shape == (B, 1)
    np.testing.assert_allclose(np.asarray(out), ref, rtol=1e-2, atol=1e-2)
    print("KERNEL_OK")
</pallas_src>

<mosaic_0001>
module attributes {stable_mosaic.version = 11 : i64} {
  func.func @_fm_kernel(%arg0: i32, %arg1: memref<8x32xf32, #tpu.memory_space<vmem>>, %arg2: memref<32x8xf32, #tpu.memory_space<vmem>>, %arg3: memref<1x32xf32, #tpu.memory_space<vmem>>, %arg4: memref<1x1xf32, #tpu.memory_space<vmem>>, %arg5: memref<8x1xf32, #tpu.memory_space<vmem>>) attributes {dimension_semantics = [#tpu.dimension_semantics<parallel>], iteration_bounds = array<i64: 1>, scalar_prefetch = 0 : i64, scratch_operands = 0 : i64, tpu.core_type = #tpu.core_type<tc>, window_params = [{transform_indices = @transform_0, window_bounds = array<i64: 8, 32>}, {pipeline_mode = #tpu.pipeline_mode<synchronous>, transform_indices = @transform_1, window_bounds = array<i64: 32, 8>}, {pipeline_mode = #tpu.pipeline_mode<synchronous>, transform_indices = @transform_2, window_bounds = array<i64: 1, 32>}, {pipeline_mode = #tpu.pipeline_mode<synchronous>, transform_indices = @transform_3, window_bounds = array<i64: 1, 1>}, {transform_indices = @transform_4, window_bounds = array<i64: 8, 1>}]} {
    %c0 = arith.constant 0 : index
    %c0_0 = arith.constant 0 : index
    %0 = vector.load %arg1[%c0, %c0_0] : memref<8x32xf32, #tpu.memory_space<vmem>>, vector<8x32xf32>
    %c0_1 = arith.constant 0 : index
    %c0_2 = arith.constant 0 : index
    %1 = vector.load %arg2[%c0_1, %c0_2] : memref<32x8xf32, #tpu.memory_space<vmem>>, vector<32x8xf32>
    %cst = arith.constant dense<0.000000e+00> : vector<8x8xf32>
    %2 = tpu.matmul %0, %1, %cst {dimension_numbers = #tpu.dot_dimension_numbers<[1], [0], [0], [1], [0, 0, 1, 1], [], []>} : vector<8x32xf32>, vector<32x8xf32>, vector<8x8xf32> -> vector<8x8xf32>
    %3 = arith.mulf %0, %0 : vector<8x32xf32>
    %4 = arith.mulf %1, %1 : vector<32x8xf32>
    %cst_3 = arith.constant dense<0.000000e+00> : vector<8x8xf32>
    %5 = tpu.matmul %3, %4, %cst_3 {dimension_numbers = #tpu.dot_dimension_numbers<[1], [0], [0], [1], [0, 0, 1, 1], [], []>} : vector<8x32xf32>, vector<32x8xf32>, vector<8x8xf32> -> vector<8x8xf32>
    %6 = arith.mulf %2, %2 : vector<8x8xf32>
    %7 = arith.subf %6, %5 : vector<8x8xf32>
    %cst_4 = arith.constant dense<0.000000e+00> : vector<8xf32>
    %8 = vector.multi_reduction <add>, %7, %cst_4 [1] : vector<8x8xf32> to vector<8xf32>
    %9 = vector.shape_cast %8 : vector<8xf32> to vector<8x1xf32>
    %c0_5 = arith.constant 0 : index
    %c0_6 = arith.constant 0 : index
    %10 = vector.load %arg3[%c0_5, %c0_6] : memref<1x32xf32, #tpu.memory_space<vmem>>, vector<1x32xf32>
    %11 = vector.broadcast %10 : vector<1x32xf32> to vector<8x32xf32>
    %12 = arith.mulf %0, %11 : vector<8x32xf32>
    %cst_7 = arith.constant dense<0.000000e+00> : vector<8xf32>
    %13 = vector.multi_reduction <add>, %12, %cst_7 [1] : vector<8x32xf32> to vector<8xf32>
    %14 = vector.shape_cast %13 : vector<8xf32> to vector<8x1xf32>
    %c0_8 = arith.constant 0 : index
    %c0_9 = arith.constant 0 : index
    %15 = vector.load %arg4[%c0_8, %c0_9] : memref<1x1xf32, #tpu.memory_space<vmem>>, vector<1x1xf32>
    %16 = vector.broadcast %15 : vector<1x1xf32> to vector<8x1xf32>
    %17 = arith.addf %14, %16 : vector<8x1xf32>
    %cst_10 = arith.constant 5.000000e-01 : f32
    %18 = vector.broadcast %cst_10 : f32 to vector<8x1xf32>
    %19 = arith.mulf %18, %9 : vector<8x1xf32>
    %20 = arith.addf %17, %19 : vector<8x1xf32>
    %c0_11 = arith.constant 0 : index
    %c0_12 = arith.constant 0 : index
    %21 = vector.load %arg5[%c0_11, %c0_12] : memref<8x1xf32, #tpu.memory_space<vmem>>, vector<8x1xf32>
    tpu.vector_store %arg5[%c0_11, %c0_12], %20 {strides = array<i32>} : memref<8x1xf32, #tpu.memory_space<vmem>>, vector<8x1xf32>,
    return
  }
  func.func @transform_0(%arg0: i32) -> (i32, i32) {
    %c0_i32 = arith.constant 0 : i32
    %c0_i32_0 = arith.constant 0 : i32
    return %arg0, %c0_i32 : i32, i32
  }
  func.func @transform_1(%arg0: i32) -> (i32, i32) {
    %c0_i32 = arith.constant 0 : i32
    %c0_i32_0 = arith.constant 0 : i32
    %c0_i32_1 = arith.constant 0 : i32
    return %c0_i32, %c0_i32_0 : i32, i32
  }
  func.func @transform_2(%arg0: i32) -> (i32, i32) {
    %c0_i32 = arith.constant 0 : i32
    %c0_i32_0 = arith.constant 0 : i32
    %c0_i32_1 = arith.constant 0 : i32
    return %c0_i32, %c0_i32_0 : i32, i32
  }
  func.func @transform_3(%arg0: i32) -> (i32, i32) {
    %c0_i32 = arith.constant 0 : i32
    %c0_i32_0 = arith.constant 0 : i32
    %c0_i32_1 = arith.constant 0 : i32
    return %c0_i32, %c0_i32_0 : i32, i32
  }
  func.func @transform_4(%arg0: i32) -> (i32, i32) {
    %c0_i32 = arith.constant 0 : i32
    %c0_i32_0 = arith.constant 0 : i32
    return %arg0, %c0_i32 : i32, i32
  }
}

</mosaic_0001>

<llo_original>
// kernel: tpu_custom_call.1
$region0: #{tpu_custom_call.1}
  #allocation0 [shape = 'u32[]', space=smem, size = 0x4, offset = 0x4, fixed_abs, tag = 'smem constant byte address 0x4 - core index']
  #allocation1 [shape = 'u32[144,128]{1,0:T(1,128)}', space=vmem, size = 0x12000, scoped, tag = 'internal scratch']
  #allocation2 [shape = 'f32[1,1]{1,0:T(1,128)S(1)}', space=vmem, size = 0x200, scoped, tag = 'scoped memory for tpu_custom_call.1']
  %s0 = inlined_call_operand.vmem [shape: f32[8,32], index: 0, kind: input, shape index: {}]
  %s1 = inlined_call_operand.vmem [shape: f32[32,8], index: 1, kind: input, shape index: {}]
  %s2 = inlined_call_operand.vmem [shape: f32[1,32], index: 2, kind: input, shape index: {}]
  %s3 = inlined_call_operand.<no memory space> [shape: f32[1,1], index: 3, kind: input, shape index: {}]
  %s4 = inlined_call_operand.vmem [shape: f32[8,1], index: 4, kind: output, shape index: {}]
  %s5 = sld [smem:[#allocation0]]
  $region26: #{tpu_custom_call.1} parent=0
    _
  %s7 = ssub.s32 1, %s5
  %s8 = scalar_select 0, %s7, %s5
  %v9 = vstv %s3
  %10 = vst [vmem:[#allocation2] sm:$0x1] %v9
  // Predicated region
  $region2: #{tpu_custom_call.1} parent=0 // pred_check
    _
  $region3: #{tpu_custom_call.1} parent=0 // pred_check_branch
    %12 = sbr.rel (0) target = $region5
  $region4: #{tpu_custom_call.1} parent=0 // pred_region
    _
  $region5: #{tpu_custom_call.1} parent=0 // pred_fallthru
    _
  // Predicated region
  $region6: #{tpu_custom_call.1} parent=0 // pred_check
    _
  $region7: #{tpu_custom_call.1} parent=0 // pred_check_branch
    %14 = sbr.rel (0) target = $region9
  $region8: #{tpu_custom_call.1} parent=0 // pred_region
    _
  $region9: #{tpu_custom_call.1} parent=0 // pred_fallthru
    _
  // Predicated region
  $region10: #{tpu_custom_call.1} parent=0 // pred_check
    _
  $region11: #{tpu_custom_call.1} parent=0 // pred_check_branch
    %16 = sbr.rel (0) target = $region13
  $region12: #{tpu_custom_call.1} parent=0 // pred_region
    _
  $region13: #{tpu_custom_call.1} parent=0 // pred_fallthru
    _
  // Predicated region
  $region14: #{tpu_custom_call.1} parent=0 // pred_check
    _
  $region15: #{tpu_custom_call.1} parent=0 // pred_check_branch
    %18 = sbr.rel (0) target = $region17
  $region16: #{tpu_custom_call.1} parent=0 // pred_region
    _
  $region17: #{tpu_custom_call.1} parent=0 // pred_fallthru
    _
  %v19 = vld [vmem:[%s0] sm:$0xff]
  %v20 = vld [vmem:[%s1] sm:$0xff]
  %v21 = vld [vmem:[%s1 + $0x8] sm:$0xff]
  %v22 = vld [vmem:[%s1 + $0x10] sm:$0xff]
  %v23 = vld [vmem:[%s1 + $0x18] sm:$0xff]
  %vm24 = vcmask 261120
  %v26 = vsel %vm24, %v19, 0
  %28 = vmatprep.subr.mxu0 0.0
  %29 = vmatpush1.msra.mxu0 0.0
  %30 = vmatprep.subr.mxu0 0.0
  %31 = vmatpush1.msra.mxu0 0.0
  %32 = vmatprep.subr.mxu0 0.0
  %33 = vmatpush1.msra.mxu0 0.0
  %34 = vmatprep.subr.mxu0 0.0
  %35 = vmatpush1.msra.mxu0 0.0
  %36 = vmatprep.subr.mxu0 0.0
  %37 = vmatpush1.msra.mxu0 0.0
  %38 = vmatprep.subr.mxu0 0.0
  %39 = vmatpush1.msra.mxu0 0.0
  %40 = vmatprep.subr.mxu0 0.0
  %41 = vmatpush1.msra.mxu0 0.0
  %42 = vmatprep.subr.mxu0 0.0
  %43 = vmatpush1.msra.mxu0 0.0
  %44 = vmatprep.subr.mxu0 0.0
  %45 = vmatpush1.msra.mxu0 0.0
  %46 = vmatprep.subr.mxu0 0.0
  %47 = vmatpush1.msra.mxu0 0.0
  %48 = vmatprep.subr.mxu0 0.0
  %49 = vmatpush1.msra.mxu0 0.0
  %50 = vmatprep.subr.mxu0 0.0
  %51 = vmatpush1.msra.mxu0 0.0
  %52 = vmatprep.subr.mxu0 0.0
  %53 = vmatpush1.msra.mxu0 %v23
  %54 = vmatprep.subr.mxu0 0.0
  %55 = vmatpush1.msra.mxu0 %v22
  %56 = vmatprep.subr.mxu0 0.0
  %57 = vmatpush1.msra.mxu0 %v21
  %58 = vmatprep.subr.mxu0 0.0
  %59 = vmatpush1.msra.mxu0 %v20
  %60 = vmatprep.subr.mxu0 0.0
  %61 = vmatpush2.msra.mxu0 0.0
  %62 = vmatprep.subr.mxu0 0.0
  %63 = vmatpush2.msra.mxu0 0.0
  %64 = vmatprep.subr.mxu0 0.0
  %65 = vmatpush2.msra.mxu0 0.0
  %66 = vmatprep.subr.mxu0 0.0
  %67 = vmatpush2.msra.mxu0 0.0
  %68 = vmatprep.subr.mxu0 0.0
  %69 = vmatpush2.msra.mxu0 0.0
  %70 = vmatprep.subr.mxu0 0.0
  %71 = vmatpush2.msra.mxu0 0.0
  %72 = vmatprep.subr.mxu0 0.0
  %73 = vmatpush2.msra.mxu0 0.0
  %74 = vmatprep.subr.mxu0 0.0
  %75 = vmatpush2.msra.mxu0 0.0
  %76 = vmatprep.subr.mxu0 0.0
  %77 = vmatpush2.msra.mxu0 0.0
  %78 = vmatprep.subr.mxu0 0.0
  %79 = vmatpush2.msra.mxu0 0.0
  %80 = vmatprep.subr.mxu0 0.0
  %81 = vmatpush2.msra.mxu0 0.0
  %82 = vmatprep.subr.mxu0 0.0
  %83 = vmatpush2.msra.mxu0 0.0
  %84 = vmatprep.subr.mxu0 0.0
  %85 = vmatpush2.msra.mxu0 0.0
  %86 = vmatprep.subr.mxu0 0.0
  %87 = vmatpush2.msra.mxu0 0.0
  %88 = vmatprep.subr.mxu0 0.0
  %89 = vmatpush2.msra.mxu0 0.0
  %90 = vmatprep.subr.mxu0 0.0
  %91 = vmatpush2.msra.mxu0 0.0
  %92 = vmatprep.mubr.f32.mxu0 0.0
  %93 = vmatmul.mubr.f32.gmra.mxu0 %v26
  %v94 = vpop.f32.mrf.mxu0
  %v95 = vadd.f32 0.0, %v94
  %v96 = vpop.f32.mrf.mxu0
  %97 = vdwg.mxu0
  %v98 = vmul.f32 %v19, %v19
  %v99 = vmul.f32 %v20, %v20
  %v100 = vmul.f32 %v21, %v21
  %v101 = vmul.f32 %v22, %v22
  %v102 = vmul.f32 %v23, %v23
  %v104 = vsel %vm24, %v98, 0
  %106 = vmatprep.subr.mxu0 0.0
  %107 = vmatpush1.msra.mxu0 0.0
  %108 = vmatprep.subr.mxu0 0.0
  %109 = vmatpush1.msra.mxu0 0.0
  %110 = vmatprep.subr.mxu0 0.0
  %111 = vmatpush1.msra.mxu0 0.0
  %112 = vmatprep.subr.mxu0 0.0
  %113 = vmatpush1.msra.mxu0 0.0
  %114 = vmatprep.subr.mxu0 0.0
  %115 = vmatpush1.msra.mxu0 0.0
  %116 = vmatprep.subr.mxu0 0.0
  %117 = vmatpush1.msra.mxu0 0.0
  %118 = vmatprep.subr.mxu0 0.0
  %119 = vmatpush1.msra.mxu0 0.0
  %120 = vmatprep.subr.mxu0 0.0
  %121 = vmatpush1.msra.mxu0 0.0
  %122 = vmatprep.subr.mxu0 0.0
  %123 = vmatpush1.msra.mxu0 0.0
  %124 = vmatprep.subr.mxu0 0.0
  %125 = vmatpush1.msra.mxu0 0.0
  %126 = vmatprep.subr.mxu0 0.0
  %127 = vmatpush1.msra.mxu0 0.0
  %128 = vmatprep.subr.mxu0 0.0
  %129 = vmatpush1.msra.mxu0 0.0
  %130 = vmatprep.subr.mxu0 0.0
  %131 = vmatpush1.msra.mxu0 %v102
  %132 = vmatprep.subr.mxu0 0.0
  %133 = vmatpush1.msra.mxu0 %v101
  %134 = vmatprep.subr.mxu0 0.0
  %135 = vmatpush1.msra.mxu0 %v100
  %136 = vmatprep.subr.mxu0 0.0
  %137 = vmatpush1.msra.mxu0 %v99
  %138 = vmatprep.subr.mxu0 0.0
  %139 = vmatpush2.msra.mxu0 0.0
  %140 = vmatprep.subr.mxu0 0.0
  %141 = vmatpush2.msra.mxu0 0.0
  %142 = vmatprep.subr.mxu0 0.0
  %143 = vmatpush2.msra.mxu0 0.0
  %144 = vmatprep.subr.mxu0 0.0
  %145 = vmatpush2.msra.mxu0 0.0
  %146 = vmatprep.subr.mxu0 0.0
  %147 = vmatpush2.msra.mxu0 0.0
  %148 = vmatprep.subr.mxu0 0.0
  %149 = vmatpush2.msra.mxu0 0.0
  %150 = vmatprep.subr.mxu0 0.0
  %151 = vmatpush2.msra.mxu0 0.0
  %152 = vmatprep.subr.mxu0 0.0
  %153 = vmatpush2.msra.mxu0 0.0
  %154 = vmatprep.subr.mxu0 0.0
  %155 = vmatpush2.msra.mxu0 0.0
  %156 = vmatprep.subr.mxu0 0.0
  %157 = vmatpush2.msra.mxu0 0.0
  %158 = vmatprep.subr.mxu0 0.0
  %159 = vmatpush2.msra.mxu0 0.0
  %160 = vmatprep.subr.mxu0 0.0
  %161 = vmatpush2.msra.mxu0 0.0
  %162 = vmatprep.subr.mxu0 0.0
  %163 = vmatpush2.msra.mxu0 0.0
  %164 = vmatprep.subr.mxu0 0.0
  %165 = vmatpush2.msra.mxu0 0.0
  %166 = vmatprep.subr.mxu0 0.0
  %167 = vmatpush2.msra.mxu0 0.0
  %168 = vmatprep.subr.mxu0 0.0
  %169 = vmatpush2.msra.mxu0 0.0
  %170 = vmatprep.mubr.f32.mxu0 0.0
  %171 = vmatmul.mubr.f32.gmra.mxu0 %v104
  %v172 = vpop.f32.mrf.mxu0
  %v173 = vadd.f32 0.0, %v172
  %v174 = vpop.f32.mrf.mxu0
  %175 = vdwg.mxu0
  %v176 = vmul.f32 %v95, %v95
  %v177 = vsub.f32 %v176, %v173
  %vm178 = vcmask 64512
  %v179 = vsel %vm178, %v177, 0.0
  %180 = vadd.xlane.f32.xlu0 %v179
  %v181 = vpop.xlane.xlu0 %180
  %v182 = vld [vmem:[%s2] sm:$0x1]
  %v184 = vlaneseq
  %v185 = vshrl.u32 %v184, 7
  %v186 = vsub.s32 0, %v185
  %v187 = vrot.slane %v182, %v186
  %v189 = vmul.f32 %v19, %v187
  %v190 = vsel %vm24, %v189, 0.0
  %191 = vadd.xlane.f32.xlu0 %v190
  %v192 = vpop.xlane.xlu0 %191
  %v193 = vld [vmem:[#allocation2] sm:$0x1]
  %v195 = vlaneseq
  %v196 = vshrl.u32 %v195, 7
  %v197 = vsub.s32 0, %v196
  %v198 = vrot.slane %v193, %v197
  %v200 = vadd.f32 %v192, %v198
  %v201 = vmul.f32 %v181, 0.5
  %v202 = vadd.f32 %v200, %v201
  %vm203 = vcmask 7168
  %204 = vst.msk [vmem:[%s4] sm:$0xff] %vm203, %v202
  // Predicated region
  $region18: #{tpu_custom_call.1} parent=0 // pred_check
    _
  $region19: #{tpu_custom_call.1} parent=0 // pred_check_branch
    %206 = sbr.rel (0) target = $region21
  $region20: #{tpu_custom_call.1} parent=0 // pred_region
    _
  $region21: #{tpu_custom_call.1} parent=0 // pred_fallthru
    _
  // Predicated region
  $region22: #{tpu_custom_call.1} parent=0 // pred_check
    _
  $region23: #{tpu_custom_call.1} parent=0 // pred_check_branch
    %208 = sbr.rel (0) target = $region25
  $region24: #{tpu_custom_call.1} parent=0 // pred_region
    _
  $region25: #{tpu_custom_call.1} parent=0 // pred_fallthru
    _

</llo_original>
